<compile_context>
chip_gen: v5e
topology: v5e:2x2
jax: 0.10.0
libtpu: 0.0.40
codegen_flags: <defaults>
</compile_context>

<pallas_src>
import jax
import jax.numpy as jnp
from jax import lax
from jax.experimental import pallas as pl
from jax.experimental.pallas import tpu as pltpu


def _round_up(n: int, m: int) -> int:
    return ((n + m - 1) // m) * m


def _cdiv(a: int, b: int) -> int:
    return -(-a // b)


def simple_rnn_forward(x, params, *, recurrence_dtype=jnp.float32):
    """x: (batch, seq) float32. Returns (batch, output_size) float32."""
    w_ih, w_hh, b_ih, b_hh, w_fc, b_fc = (
        params["w_ih"], params["w_hh"], params["b_ih"],
        params["b_hh"], params["w_fc"], params["b_fc"],
    )
    B, S = x.shape
    H = w_hh.shape[0]
    O = w_fc.shape[0]
    rec_dtype = jnp.dtype(recurrence_dtype)

    # Lane-dense padding (zeros are exact no-ops for matmul / ReLU here).
    H_pad = _round_up(H, 128)
    O_pad = _round_up(O, 128)

    # Batch tiling. x is time-major (S, B_pad) so the batch axis is the lane
    # axis -> tiles must be 128-wide or full-width (see header comment).
    if B <= 128:
        TB = _round_up(max(B, 1), 8)
        B_pad = TB
    else:
        TB = 128
        B_pad = _round_up(B, TB)
    grid = (B_pad // TB,)

    # Time chunking for the xw scratch: bound scratch to ~8 MiB, cap chunk at 64.
    t_fit = max(1, (8 << 20) // (2 * TB * H_pad * 4))
    T_CHUNK = int(min(S, 64, t_fit))
    n_chunks = _cdiv(S, T_CHUNK)
    n_slots = 1 if n_chunks == 1 else 2

    def kernel(x_ref, w_ih_ref, w_hh_t_ref, b_ref, w_fc_t_ref, b_fc_ref,
               out_ref, xw_ref):
        """Fused ReLU-RNN recurrence + FC head for one batch tile.

        x_ref      : (S, TB)                     f32  time-major input slice
        w_ih_ref   : (1, H_pad)                  f32  weight_ih_l0 row (padded)
        w_hh_t_ref : (H_pad, H_pad)              rec  weight_hh_l0^T (padded)
        b_ref      : (1, H_pad)                  f32  b_ih + b_hh (padded)
        w_fc_t_ref : (H_pad, O_pad)              f32  fc.weight^T (padded)
        b_fc_ref   : (1, O_pad)                  f32  fc.bias (padded)
        out_ref    : (TB, O_pad)                 f32
        xw_ref     : (n_slots*T_CHUNK, TB, H_pad) f32 chunked hoisted x*w_ih+b
        """
        w_ih_row = w_ih_ref[...]          # (1, H_pad)
        b_row = b_ref[...]                # (1, H_pad)

        def fill_chunk(c):
            # Hoisted, chunked input contribution: xw[t] = x[t][:,None]*w_ih + b.
            # Pure VPU/vst work, independent of the recurrence carry.
            start = c * T_CHUNK
            size = min(T_CHUNK, S - start)          # static python int
            off = (c % n_slots) * T_CHUNK           # static python int
            xw_ref[off:off + size] = (
                x_ref[start:start + size][:, :, None] * w_ih_row[None, :, :]
                + b_row[None, :, :])

        fill_chunk(0)
        h = jnp.zeros((TB, H_pad), jnp.float32)

        for c in range(n_chunks):                   # static chunk loop
            if c + 1 < n_chunks:
                # Double-buffered fill of the NEXT chunk; no data dependence on
                # the recurrence below, so it can hide under MXU latency.
                fill_chunk(c + 1)

            off = (c % n_slots) * T_CHUNK
            steps = min(T_CHUNK, S - c * T_CHUNK)   # static python int

            def step(t, h, _off=off):
                # Single dependent MXU matmul + fused ReLU on the critical path.
                # W_hh^T is read from VMEM each step (vld slots are idle).
                zt = jnp.dot(h.astype(rec_dtype), w_hh_t_ref[...],
                             preferred_element_type=jnp.float32)
                return jnp.maximum(xw_ref[_off + t] + zt, 0.0)

            h = lax.fori_loop(0, steps, step, h,
                              unroll=True if steps <= 32 else 8)

        # FC head on the last hidden state (== rnn_out[:, -1, :]).
        out_ref[...] = (
            jnp.dot(h, w_fc_t_ref[...], preferred_element_type=jnp.float32)
            + b_fc_ref[...])

    # Glue: pad / transpose parameters outside the kernel.
    xT = jnp.pad(x.T.astype(jnp.float32), ((0, 0), (0, B_pad - B)))           # (S, B_pad)
    w_ih_row = jnp.pad(w_ih.astype(jnp.float32).reshape(1, H),
                       ((0, 0), (0, H_pad - H)))                              # (1, H_pad)
    w_hh_t = jnp.pad(w_hh.astype(jnp.float32).T,
                     ((0, H_pad - H), (0, H_pad - H))).astype(rec_dtype)      # (H_pad, H_pad)
    b = jnp.pad((b_ih + b_hh).astype(jnp.float32).reshape(1, H),
                ((0, 0), (0, H_pad - H)))                                     # (1, H_pad)
    w_fc_t = jnp.pad(w_fc.astype(jnp.float32).T,
                     ((0, H_pad - H), (0, O_pad - O)))                        # (H_pad, O_pad)
    b_fc_row = jnp.pad(b_fc.astype(jnp.float32).reshape(1, O),
                       ((0, 0), (0, O_pad - O)))                              # (1, O_pad)

    # VMEM footprint (bytes, generous) -> explicit scoped-VMEM limit.
    est_bytes = 4 * (
        n_slots * T_CHUNK * TB * H_pad            # xw scratch
        + 2 * S * TB                              # x block (double-buffered)
        + 2 * TB * O_pad                          # out block (double-buffered)
        + 2 * (H_pad * H_pad + H_pad * O_pad + 3 * H_pad + O_pad))
    vmem_limit = int(min(max(2 * est_bytes + (4 << 20), 16 << 20), 48 << 20))

    cost = pl.CostEstimate(
        flops=int(2 * S * B_pad * H_pad * (H_pad + 1)
                  + 2 * B_pad * H_pad * O_pad),
        transcendentals=0,
        bytes_accessed=int(4 * (S * B_pad + B_pad * O_pad
                                + H_pad * H_pad + H_pad * O_pad
                                + 3 * H_pad + O_pad)),
    )

    const = lambda shape: pl.BlockSpec(shape, lambda i: (0, 0))

    out_padded = pl.pallas_call(
        kernel,
        out_shape=jax.ShapeDtypeStruct((B_pad, O_pad), jnp.float32),
        grid_spec=pltpu.PrefetchScalarGridSpec(
            num_scalar_prefetch=0,
            grid=grid,
            in_specs=[
                pl.BlockSpec((S, TB), lambda i: (0, i)),      # x (time-major)
                const((1, H_pad)),                            # w_ih row
                const((H_pad, H_pad)),                        # w_hh^T (resident)
                const((1, H_pad)),                            # combined bias
                const((H_pad, O_pad)),                        # fc weight^T
                const((1, O_pad)),                            # fc bias
            ],
            out_specs=pl.BlockSpec((TB, O_pad), lambda i: (i, 0)),
            scratch_shapes=[
                pltpu.VMEM((n_slots * T_CHUNK, TB, H_pad), jnp.float32)],
        ),
        compiler_params=pltpu.CompilerParams(
            dimension_semantics=("parallel",),   # batch axis -> 2 TCs on v7x
            vmem_limit_bytes=vmem_limit,
        ),
        cost_estimate=cost,
    )(xT, w_ih_row, w_hh_t, b, w_fc_t, b_fc_row)

    return out_padded[:B, :O]


def init_params(key, hidden_size, output_size):
    """Deterministic init mimicking PyTorch's U(-1/sqrt(H), 1/sqrt(H)) scheme."""
    ks = jax.random.split(key, 6)
    bound = 1.0 / jnp.sqrt(hidden_size)
    u = lambda k, shape: jax.random.uniform(k, shape, jnp.float32, -bound, bound)
    return {
        "w_ih": u(ks[0], (hidden_size, 1)),                 # weight_ih_l0
        "w_hh": u(ks[1], (hidden_size, hidden_size)),       # weight_hh_l0
        "b_ih": u(ks[2], (hidden_size,)),
        "b_hh": u(ks[3], (hidden_size,)),
        "w_fc": u(ks[4], (output_size, hidden_size)),       # fc.weight
        "b_fc": u(ks[5], (output_size,)),
    }


def _reference_forward(x, params):
    """Pure-JAX reference matching PyTorch semantics (f32)."""
    w_ih, w_hh = params["w_ih"], params["w_hh"]
    b = params["b_ih"] + params["b_hh"]
    B, S = x.shape
    H = w_hh.shape[0]
    h = jnp.zeros((B, H), jnp.float32)
    for t in range(S):
        h = jnp.maximum(x[:, t:t + 1] @ w_ih.T + h @ w_hh.T + b, 0.0)
    return h @ params["w_fc"].T + params["b_fc"]


if __name__ == "__main__":
    batch, seq, hidden, output = 2, 8, 32, 4

    key = jax.random.PRNGKey(0)
    k_x, k_p = jax.random.split(key)
    x = jax.random.normal(k_x, (batch, seq), jnp.float32)
    params = init_params(k_p, hidden, output)

    # f32 recurrence: exact PyTorch semantics.
    out = jax.block_until_ready(simple_rnn_forward(x, params))
    ref = _reference_forward(x, params)
    assert out.shape == (batch, output)
    assert jnp.allclose(out, ref, atol=1e-5, rtol=1e-5)

    # Optional bf16 recurrence matmul (f32 accumulation): faster MXU path,
    # rounding compounds over the sequence -> loose tolerance check only.
    out_bf16 = jax.block_until_ready(
        simple_rnn_forward(x, params, recurrence_dtype=jnp.bfloat16))
    assert out_bf16.shape == (batch, output)
    assert jnp.allclose(out_bf16, ref, atol=1.5e-1, rtol=1.5e-1)

    print("KERNEL_OK")
</pallas_src>

<mosaic_0001>
module attributes {stable_mosaic.version = 11 : i64} {
  func.func @kernel(%arg0: i32, %arg1: memref<8x8xf32, #tpu.memory_space<vmem>>, %arg2: memref<1x128xf32, #tpu.memory_space<vmem>>, %arg3: memref<128x128xf32, #tpu.memory_space<vmem>>, %arg4: memref<1x128xf32, #tpu.memory_space<vmem>>, %arg5: memref<128x128xf32, #tpu.memory_space<vmem>>, %arg6: memref<1x128xf32, #tpu.memory_space<vmem>>, %arg7: memref<8x128xf32, #tpu.memory_space<vmem>>, %arg8: memref<8x8x128xf32, #tpu.memory_space<vmem>>) attributes {dimension_semantics = [#tpu.dimension_semantics<parallel>], iteration_bounds = array<i64: 1>, scalar_prefetch = 0 : i64, scratch_operands = 1 : i64, tpu.core_type = #tpu.core_type<tc>, window_params = [{transform_indices = @transform_0, window_bounds = array<i64: 8, 8>}, {pipeline_mode = #tpu.pipeline_mode<synchronous>, transform_indices = @transform_1, window_bounds = array<i64: 1, 128>}, {pipeline_mode = #tpu.pipeline_mode<synchronous>, transform_indices = @transform_2, window_bounds = array<i64: 128, 128>}, {pipeline_mode = #tpu.pipeline_mode<synchronous>, transform_indices = @transform_3, window_bounds = array<i64: 1, 128>}, {pipeline_mode = #tpu.pipeline_mode<synchronous>, transform_indices = @transform_4, window_bounds = array<i64: 128, 128>}, {pipeline_mode = #tpu.pipeline_mode<synchronous>, transform_indices = @transform_5, window_bounds = array<i64: 1, 128>}, {transform_indices = @transform_6, window_bounds = array<i64: 8, 128>}]} {
    %c0 = arith.constant 0 : index
    %c0_0 = arith.constant 0 : index
    %0 = vector.load %arg2[%c0, %c0_0] : memref<1x128xf32, #tpu.memory_space<vmem>>, vector<1x128xf32>
    %c0_1 = arith.constant 0 : index
    %c0_2 = arith.constant 0 : index
    %1 = vector.load %arg4[%c0_1, %c0_2] : memref<1x128xf32, #tpu.memory_space<vmem>>, vector<1x128xf32>
    %c0_3 = arith.constant 0 : index
    %c0_4 = arith.constant 0 : index
    %2 = vector.load %arg1[%c0_3, %c0_4] : memref<8x8xf32, #tpu.memory_space<vmem>>, vector<8x8xf32>
    %3 = vector.shape_cast %2 : vector<8x8xf32> to vector<8x8x1xf32>
    %4 = vector.shape_cast %0 : vector<1x128xf32> to vector<1x1x128xf32>
    %5 = vector.broadcast %3 : vector<8x8x1xf32> to vector<8x8x128xf32>
    %6 = vector.broadcast %4 : vector<1x1x128xf32> to vector<8x8x128xf32>
    %7 = arith.mulf %5, %6 : vector<8x8x128xf32>
    %8 = vector.shape_cast %1 : vector<1x128xf32> to vector<1x1x128xf32>
    %9 = vector.broadcast %8 : vector<1x1x128xf32> to vector<8x8x128xf32>
    %10 = arith.addf %7, %9 : vector<8x8x128xf32>
    %c0_5 = arith.constant 0 : index
    %c0_6 = arith.constant 0 : index
    %c0_7 = arith.constant 0 : index
    %11 = vector.load %arg8[%c0_5, %c0_6, %c0_7] : memref<8x8x128xf32, #tpu.memory_space<vmem>>, vector<8x8x128xf32>
    tpu.vector_store %arg8[%c0_5, %c0_6, %c0_7], %10 {strides = array<i32>} : memref<8x8x128xf32, #tpu.memory_space<vmem>>, vector<8x8x128xf32>,
    %cst = arith.constant 0.000000e+00 : f32
    %12 = vector.broadcast %cst : f32 to vector<8x128xf32>
    %c0_i32 = arith.constant 0 : i32
    %c0_8 = arith.constant 0 : index
    %c0_9 = arith.constant 0 : index
    %13 = vector.load %arg3[%c0_8, %c0_9] : memref<128x128xf32, #tpu.memory_space<vmem>>, vector<128x128xf32>
    %cst_10 = arith.constant dense<0.000000e+00> : vector<8x128xf32>
    %14 = tpu.matmul %12, %13, %cst_10 {dimension_numbers = #tpu.dot_dimension_numbers<[1], [0], [0], [1], [0, 0, 1, 1], [], []>} : vector<8x128xf32>, vector<128x128xf32>, vector<8x128xf32> -> vector<8x128xf32>
    %c0_i32_11 = arith.constant 0 : i32
    %15 = arith.addi %c0_i32_11, %c0_i32 : i32
    %16 = arith.index_cast %15 : i32 to index
    %c0_12 = arith.constant 0 : index
    %c0_13 = arith.constant 0 : index
    %17 = vector.load %arg8[%16, %c0_12, %c0_13] : memref<8x8x128xf32, #tpu.memory_space<vmem>>, vector<1x8x128xf32>
    %18 = vector.shape_cast %17 : vector<1x8x128xf32> to vector<8x128xf32>
    %19 = arith.addf %18, %14 : vector<8x128xf32>
    %cst_14 = arith.constant 0.000000e+00 : f32
    %20 = vector.broadcast %cst_14 : f32 to vector<8x128xf32>
    %21 = arith.maximumf %19, %20 : vector<8x128xf32>
    %c1_i32 = arith.constant 1 : i32
    %c0_15 = arith.constant 0 : index
    %c0_16 = arith.constant 0 : index
    %22 = vector.load %arg3[%c0_15, %c0_16] : memref<128x128xf32, #tpu.memory_space<vmem>>, vector<128x128xf32>
    %cst_17 = arith.constant dense<0.000000e+00> : vector<8x128xf32>
    %23 = tpu.matmul %21, %22, %cst_17 {dimension_numbers = #tpu.dot_dimension_numbers<[1], [0], [0], [1], [0, 0, 1, 1], [], []>} : vector<8x128xf32>, vector<128x128xf32>, vector<8x128xf32> -> vector<8x128xf32>
    %c0_i32_18 = arith.constant 0 : i32
    %24 = arith.addi %c0_i32_18, %c1_i32 : i32
    %25 = arith.index_cast %24 : i32 to index
    %c0_19 = arith.constant 0 : index
    %c0_20 = arith.constant 0 : index
    %26 = vector.load %arg8[%25, %c0_19, %c0_20] : memref<8x8x128xf32, #tpu.memory_space<vmem>>, vector<1x8x128xf32>
    %27 = vector.shape_cast %26 : vector<1x8x128xf32> to vector<8x128xf32>
    %28 = arith.addf %27, %23 : vector<8x128xf32>
    %cst_21 = arith.constant 0.000000e+00 : f32
    %29 = vector.broadcast %cst_21 : f32 to vector<8x128xf32>
    %30 = arith.maximumf %28, %29 : vector<8x128xf32>
    %c2_i32 = arith.constant 2 : i32
    %c0_22 = arith.constant 0 : index
    %c0_23 = arith.constant 0 : index
    %31 = vector.load %arg3[%c0_22, %c0_23] : memref<128x128xf32, #tpu.memory_space<vmem>>, vector<128x128xf32>
    %cst_24 = arith.constant dense<0.000000e+00> : vector<8x128xf32>
    %32 = tpu.matmul %30, %31, %cst_24 {dimension_numbers = #tpu.dot_dimension_numbers<[1], [0], [0], [1], [0, 0, 1, 1], [], []>} : vector<8x128xf32>, vector<128x128xf32>, vector<8x128xf32> -> vector<8x128xf32>
    %c0_i32_25 = arith.constant 0 : i32
    %33 = arith.addi %c0_i32_25, %c2_i32 : i32
    %34 = arith.index_cast %33 : i32 to index
    %c0_26 = arith.constant 0 : index
    %c0_27 = arith.constant 0 : index
    %35 = vector.load %arg8[%34, %c0_26, %c0_27] : memref<8x8x128xf32, #tpu.memory_space<vmem>>, vector<1x8x128xf32>
    %36 = vector.shape_cast %35 : vector<1x8x128xf32> to vector<8x128xf32>
    %37 = arith.addf %36, %32 : vector<8x128xf32>
    %cst_28 = arith.constant 0.000000e+00 : f32
    %38 = vector.broadcast %cst_28 : f32 to vector<8x128xf32>
    %39 = arith.maximumf %37, %38 : vector<8x128xf32>
    %c3_i32 = arith.constant 3 : i32
    %c0_29 = arith.constant 0 : index
    %c0_30 = arith.constant 0 : index
    %40 = vector.load %arg3[%c0_29, %c0_30] : memref<128x128xf32, #tpu.memory_space<vmem>>, vector<128x128xf32>
    %cst_31 = arith.constant dense<0.000000e+00> : vector<8x128xf32>
    %41 = tpu.matmul %39, %40, %cst_31 {dimension_numbers = #tpu.dot_dimension_numbers<[1], [0], [0], [1], [0, 0, 1, 1], [], []>} : vector<8x128xf32>, vector<128x128xf32>, vector<8x128xf32> -> vector<8x128xf32>
    %c0_i32_32 = arith.constant 0 : i32
    %42 = arith.addi %c0_i32_32, %c3_i32 : i32
    %43 = arith.index_cast %42 : i32 to index
    %c0_33 = arith.constant 0 : index
    %c0_34 = arith.constant 0 : index
    %44 = vector.load %arg8[%43, %c0_33, %c0_34] : memref<8x8x128xf32, #tpu.memory_space<vmem>>, vector<1x8x128xf32>
    %45 = vector.shape_cast %44 : vector<1x8x128xf32> to vector<8x128xf32>
    %46 = arith.addf %45, %41 : vector<8x128xf32>
    %cst_35 = arith.constant 0.000000e+00 : f32
    %47 = vector.broadcast %cst_35 : f32 to vector<8x128xf32>
    %48 = arith.maximumf %46, %47 : vector<8x128xf32>
    %c4_i32 = arith.constant 4 : i32
    %c0_36 = arith.constant 0 : index
    %c0_37 = arith.constant 0 : index
    %49 = vector.load %arg3[%c0_36, %c0_37] : memref<128x128xf32, #tpu.memory_space<vmem>>, vector<128x128xf32>
    %cst_38 = arith.constant dense<0.000000e+00> : vector<8x128xf32>
    %50 = tpu.matmul %48, %49, %cst_38 {dimension_numbers = #tpu.dot_dimension_numbers<[1], [0], [0], [1], [0, 0, 1, 1], [], []>} : vector<8x128xf32>, vector<128x128xf32>, vector<8x128xf32> -> vector<8x128xf32>
    %c0_i32_39 = arith.constant 0 : i32
    %51 = arith.addi %c0_i32_39, %c4_i32 : i32
    %52 = arith.index_cast %51 : i32 to index
    %c0_40 = arith.constant 0 : index
    %c0_41 = arith.constant 0 : index
    %53 = vector.load %arg8[%52, %c0_40, %c0_41] : memref<8x8x128xf32, #tpu.memory_space<vmem>>, vector<1x8x128xf32>
    %54 = vector.shape_cast %53 : vector<1x8x128xf32> to vector<8x128xf32>
    %55 = arith.addf %54, %50 : vector<8x128xf32>
    %cst_42 = arith.constant 0.000000e+00 : f32
    %56 = vector.broadcast %cst_42 : f32 to vector<8x128xf32>
    %57 = arith.maximumf %55, %56 : vector<8x128xf32>
    %c5_i32 = arith.constant 5 : i32
    %c0_43 = arith.constant 0 : index
    %c0_44 = arith.constant 0 : index
    %58 = vector.load %arg3[%c0_43, %c0_44] : memref<128x128xf32, #tpu.memory_space<vmem>>, vector<128x128xf32>
    %cst_45 = arith.constant dense<0.000000e+00> : vector<8x128xf32>
    %59 = tpu.matmul %57, %58, %cst_45 {dimension_numbers = #tpu.dot_dimension_numbers<[1], [0], [0], [1], [0, 0, 1, 1], [], []>} : vector<8x128xf32>, vector<128x128xf32>, vector<8x128xf32> -> vector<8x128xf32>
    %c0_i32_46 = arith.constant 0 : i32
    %60 = arith.addi %c0_i32_46, %c5_i32 : i32
    %61 = arith.index_cast %60 : i32 to index
    %c0_47 = arith.constant 0 : index
    %c0_48 = arith.constant 0 : index
    %62 = vector.load %arg8[%61, %c0_47, %c0_48] : memref<8x8x128xf32, #tpu.memory_space<vmem>>, vector<1x8x128xf32>
    %63 = vector.shape_cast %62 : vector<1x8x128xf32> to vector<8x128xf32>
    %64 = arith.addf %63, %59 : vector<8x128xf32>
    %cst_49 = arith.constant 0.000000e+00 : f32
    %65 = vector.broadcast %cst_49 : f32 to vector<8x128xf32>
    %66 = arith.maximumf %64, %65 : vector<8x128xf32>
    %c6_i32 = arith.constant 6 : i32
    %c0_50 = arith.constant 0 : index
    %c0_51 = arith.constant 0 : index
    %67 = vector.load %arg3[%c0_50, %c0_51] : memref<128x128xf32, #tpu.memory_space<vmem>>, vector<128x128xf32>
    %cst_52 = arith.constant dense<0.000000e+00> : vector<8x128xf32>
    %68 = tpu.matmul %66, %67, %cst_52 {dimension_numbers = #tpu.dot_dimension_numbers<[1], [0], [0], [1], [0, 0, 1, 1], [], []>} : vector<8x128xf32>, vector<128x128xf32>, vector<8x128xf32> -> vector<8x128xf32>
    %c0_i32_53 = arith.constant 0 : i32
    %69 = arith.addi %c0_i32_53, %c6_i32 : i32
    %70 = arith.index_cast %69 : i32 to index
    %c0_54 = arith.constant 0 : index
    %c0_55 = arith.constant 0 : index
    %71 = vector.load %arg8[%70, %c0_54, %c0_55] : memref<8x8x128xf32, #tpu.memory_space<vmem>>, vector<1x8x128xf32>
    %72 = vector.shape_cast %71 : vector<1x8x128xf32> to vector<8x128xf32>
    %73 = arith.addf %72, %68 : vector<8x128xf32>
    %cst_56 = arith.constant 0.000000e+00 : f32
    %74 = vector.broadcast %cst_56 : f32 to vector<8x128xf32>
    %75 = arith.maximumf %73, %74 : vector<8x128xf32>
    %c7_i32 = arith.constant 7 : i32
    %c0_57 = arith.constant 0 : index
    %c0_58 = arith.constant 0 : index
    %76 = vector.load %arg3[%c0_57, %c0_58] : memref<128x128xf32, #tpu.memory_space<vmem>>, vector<128x128xf32>
    %cst_59 = arith.constant dense<0.000000e+00> : vector<8x128xf32>
    %77 = tpu.matmul %75, %76, %cst_59 {dimension_numbers = #tpu.dot_dimension_numbers<[1], [0], [0], [1], [0, 0, 1, 1], [], []>} : vector<8x128xf32>, vector<128x128xf32>, vector<8x128xf32> -> vector<8x128xf32>
    %c0_i32_60 = arith.constant 0 : i32
    %78 = arith.addi %c0_i32_60, %c7_i32 : i32
    %79 = arith.index_cast %78 : i32 to index
    %c0_61 = arith.constant 0 : index
    %c0_62 = arith.constant 0 : index
    %80 = vector.load %arg8[%79, %c0_61, %c0_62] : memref<8x8x128xf32, #tpu.memory_space<vmem>>, vector<1x8x128xf32>
    %81 = vector.shape_cast %80 : vector<1x8x128xf32> to vector<8x128xf32>
    %82 = arith.addf %81, %77 : vector<8x128xf32>
    %cst_63 = arith.constant 0.000000e+00 : f32
    %83 = vector.broadcast %cst_63 : f32 to vector<8x128xf32>
    %84 = arith.maximumf %82, %83 : vector<8x128xf32>
    %c8_i32 = arith.constant 8 : i32
    %c0_64 = arith.constant 0 : index
    %c0_65 = arith.constant 0 : index
    %85 = vector.load %arg5[%c0_64, %c0_65] : memref<128x128xf32, #tpu.memory_space<vmem>>, vector<128x128xf32>
    %cst_66 = arith.constant dense<0.000000e+00> : vector<8x128xf32>
    %86 = tpu.matmul %84, %85, %cst_66 {dimension_numbers = #tpu.dot_dimension_numbers<[1], [0], [0], [1], [0, 0, 1, 1], [], []>} : vector<8x128xf32>, vector<128x128xf32>, vector<8x128xf32> -> vector<8x128xf32>
    %c0_67 = arith.constant 0 : index
    %c0_68 = arith.constant 0 : index
    %87 = vector.load %arg6[%c0_67, %c0_68] : memref<1x128xf32, #tpu.memory_space<vmem>>, vector<1x128xf32>
    %88 = vector.broadcast %87 : vector<1x128xf32> to vector<8x128xf32>
    %89 = arith.addf %86, %88 : vector<8x128xf32>
    %c0_69 = arith.constant 0 : index
    %c0_70 = arith.constant 0 : index
    %90 = vector.load %arg7[%c0_69, %c0_70] : memref<8x128xf32, #tpu.memory_space<vmem>>, vector<8x128xf32>
    tpu.vector_store %arg7[%c0_69, %c0_70], %89 {strides = array<i32>} : memref<8x128xf32, #tpu.memory_space<vmem>>, vector<8x128xf32>,
    return
  }
  func.func @transform_0(%arg0: i32) -> (i32, i32) {
    %c0_i32 = arith.constant 0 : i32
    %c0_i32_0 = arith.constant 0 : i32
    return %c0_i32, %arg0 : i32, i32
  }
  func.func @transform_1(%arg0: i32) -> (i32, i32) {
    %c0_i32 = arith.constant 0 : i32
    %c0_i32_0 = arith.constant 0 : i32
    %c0_i32_1 = arith.constant 0 : i32
    return %c0_i32, %c0_i32_0 : i32, i32
  }
  func.func @transform_2(%arg0: i32) -> (i32, i32) {
    %c0_i32 = arith.constant 0 : i32
    %c0_i32_0 = arith.constant 0 : i32
    %c0_i32_1 = arith.constant 0 : i32
    return %c0_i32, %c0_i32_0 : i32, i32
  }
  func.func @transform_3(%arg0: i32) -> (i32, i32) {
    %c0_i32 = arith.constant 0 : i32
    %c0_i32_0 = arith.constant 0 : i32
    %c0_i32_1 = arith.constant 0 : i32
    return %c0_i32, %c0_i32_0 : i32, i32
  }
  func.func @transform_4(%arg0: i32) -> (i32, i32) {
    %c0_i32 = arith.constant 0 : i32
    %c0_i32_0 = arith.constant 0 : i32
    %c0_i32_1 = arith.constant 0 : i32
    return %c0_i32, %c0_i32_0 : i32, i32
  }
  func.func @transform_5(%arg0: i32) -> (i32, i32) {
    %c0_i32 = arith.constant 0 : i32
    %c0_i32_0 = arith.constant 0 : i32
    %c0_i32_1 = arith.constant 0 : i32
    return %c0_i32, %c0_i32_0 : i32, i32
  }
  func.func @transform_6(%arg0: i32) -> (i32, i32) {
    %c0_i32 = arith.constant 0 : i32
    %c0_i32_0 = arith.constant 0 : i32
    return %arg0, %c0_i32 : i32, i32
  }
}

</mosaic_0001>

<llo_original>
// kernel: tpu_custom_call.1
$region0: #{tpu_custom_call.1}
  #allocation0 [shape = 'u32[]', space=smem, size = 0x4, offset = 0x4, fixed_abs, tag = 'smem constant byte address 0x4 - core index']
  #allocation1 [shape = 'u32[72,128]{1,0:T(1,128)}', space=vmem, size = 0x9000, scoped, tag = 'internal scratch']
  #allocation2 [shape = 'f32[8,8,128]{2,1,0:T(8,128)}', space=vmem, size = 0x8000, scoped, tag = 'scratch operand']
  %s0 = inlined_call_operand.hbm [shape: f32[8,8], index: 0, kind: input, shape index: {}]
  %s1 = inlined_call_operand.hbm [shape: f32[1,128], index: 1, kind: input, shape index: {}]
  %s2 = inlined_call_operand.hbm [shape: f32[128,128], index: 2, kind: input, shape index: {}]
  %s3 = inlined_call_operand.vmem [shape: f32[1,128], index: 3, kind: input, shape index: {}]
  %s4 = inlined_call_operand.hbm [shape: f32[128,128], index: 4, kind: input, shape index: {}]
  %s5 = inlined_call_operand.vmem [shape: f32[1,128], index: 5, kind: input, shape index: {}]
  %s6 = inlined_call_operand.hbm [shape: f32[8,128], index: 6, kind: output, shape index: {}]
  %s7 = sld [smem:[#allocation0]]
  $region50: #{tpu_custom_call.1} parent=0
    _
  %s9 = ssub.s32 1, %s7
  %s10 = scalar_select 0, %s9, %s7
  $region1: #{tpu_custom_call.1} parent=0
    #allocation3 [shape = 'u8[4096]{0}', space=vmem, size = 0x1000, scoped, tag = 'input window, operand 0, single buffered']
    #allocation4 [shape = 's32[1]{0}', space=sflag, size = 0x4, scoped, tag = 'scoped memory for tpu_custom_call.1']
    #allocation5 [shape = 's32[1]{0}', space=sflag, size = 0x4, scoped, tag = 'scoped memory for tpu_custom_call.1']
    #allocation6 [shape = 'u8[512]{0}', space=vmem, size = 0x400, scoped, tag = 'input window, operand 1, single buffered']
    #allocation7 [shape = 's32[1]{0}', space=sflag, size = 0x4, scoped, tag = 'scoped memory for tpu_custom_call.1']
    #allocation8 [shape = 'u8[65536]{0}', space=vmem, size = 0x10000, scoped, tag = 'input window, operand 2, single buffered']
    #allocation9 [shape = 'u8[65536]{0}', space=vmem, size = 0x10000, scoped, tag = 'input window, operand 4, single buffered']
    #allocation10 [shape = 's32[1]{0}', space=sflag, size = 0x4, scoped, tag = 'scoped memory for tpu_custom_call.1']
    #allocation11 [shape = 'u8[4096]{0}', space=vmem, size = 0x1000, scoped, tag = 'output window, operand 0, single buffered']
    %11 = vsyncpa [#allocation4], 0
    %12 = vsyncpa [#allocation7], 0
    %13 = vsyncpa [#allocation10], 0
    %14 = vsyncpa [#allocation5], 0
    // Predicated region
    $region2: #{tpu_custom_call.1} parent=1 // pred_check
      _
    $region3: #{tpu_custom_call.1} parent=1 // pred_check_branch
      %16 = sbr.rel (0) target = $region5
    $region4: #{tpu_custom_call.1} parent=1 // pred_region
      %18 = vsyncadd [#allocation4], 0
      %s20 = sshll.u32 %s0, 4
      %s21 = int_to_ptr.hbm [resolvable:$true] %s20
      %s22 = sshll.u32 [#allocation3], 4
      %s23 = int_to_ptr.vmem [resolvable:$true] %s22
      %25 = dma.hbm_to_vmem [thread:$0]  %s21, 128, %s23, [#allocation4]
    $region5: #{tpu_custom_call.1} parent=1 // pred_fallthru
      _
    // Predicated region
    $region6: #{tpu_custom_call.1} parent=1 // pred_check
      _
    $region7: #{tpu_custom_call.1} parent=1 // pred_check_branch
      %27 = sbr.rel (0) target = $region9
    $region8: #{tpu_custom_call.1} parent=1 // pred_region
      %29 = vsyncadd [#allocation7], 0
      %s31 = sshll.u32 %s1, 4
      %s32 = int_to_ptr.hbm [resolvable:$true] %s31
      %s33 = sshll.u32 [#allocation6], 4
      %s34 = int_to_ptr.vmem [resolvable:$true] %s33
      %36 = dma.hbm_to_vmem [thread:$0]  %s32, 16, %s34, [#allocation7]
    $region9: #{tpu_custom_call.1} parent=1 // pred_fallthru
      _
    // Predicated region
    $region10: #{tpu_custom_call.1} parent=1 // pred_check
      _
    $region11: #{tpu_custom_call.1} parent=1 // pred_check_branch
      %38 = sbr.rel (0) target = $region13
    $region12: #{tpu_custom_call.1} parent=1 // pred_region
      %40 = vsyncadd [#allocation7], 0
      %s41 = sshll.u32 %s2, 4
      %s42 = int_to_ptr.hbm [resolvable:$true] %s41
      %s43 = sshll.u32 [#allocation8], 4
      %s44 = int_to_ptr.vmem [resolvable:$true] %s43
      %49 = dma.hbm_to_vmem [thread:$0]  %s42, 2048, %s44, [#allocation7], 128, 128, 8
    $region13: #{tpu_custom_call.1} parent=1 // pred_fallthru
      _
    // Predicated region
    $region14: #{tpu_custom_call.1} parent=1 // pred_check
      _
    $region15: #{tpu_custom_call.1} parent=1 // pred_check_branch
      %51 = sbr.rel (0) target = $region17
    $region16: #{tpu_custom_call.1} parent=1 // pred_region
      _
    $region17: #{tpu_custom_call.1} parent=1 // pred_fallthru
      _
    // Predicated region
    $region18: #{tpu_custom_call.1} parent=1 // pred_check
      _
    $region19: #{tpu_custom_call.1} parent=1 // pred_check_branch
      %53 = sbr.rel (0) target = $region21
    $region20: #{tpu_custom_call.1} parent=1 // pred_region
      %55 = vsyncadd [#allocation10], 0
      %s56 = sshll.u32 %s4, 4
      %s57 = int_to_ptr.hbm [resolvable:$true] %s56
      %s58 = sshll.u32 [#allocation9], 4
      %s59 = int_to_ptr.vmem [resolvable:$true] %s58
      %64 = dma.hbm_to_vmem [thread:$0]  %s57, 2048, %s59, [#allocation10], 128, 128, 8
    $region21: #{tpu_custom_call.1} parent=1 // pred_fallthru
      _
    // Predicated region
    $region22: #{tpu_custom_call.1} parent=1 // pred_check
      _
    $region23: #{tpu_custom_call.1} parent=1 // pred_check_branch
      %66 = sbr.rel (0) target = $region25
    $region24: #{tpu_custom_call.1} parent=1 // pred_region
      _
    $region25: #{tpu_custom_call.1} parent=1 // pred_fallthru
      _
    // Predicated region
    $region26: #{tpu_custom_call.1} parent=1 // pred_check
      _
    $region27: #{tpu_custom_call.1} parent=1 // pred_check_branch
      %68 = sbr.rel (0) target = $region29
    $region28: #{tpu_custom_call.1} parent=1 // pred_region
      %70 = dma.done [#allocation4], 128
    $region29: #{tpu_custom_call.1} parent=1 // pred_fallthru
      _
    // Predicated region
    $region30: #{tpu_custom_call.1} parent=1 // pred_check
      _
    $region31: #{tpu_custom_call.1} parent=1 // pred_check_branch
      %72 = sbr.rel (0) target = $region33
    $region32: #{tpu_custom_call.1} parent=1 // pred_region
      %74 = dma.done [#allocation7], 16
    $region33: #{tpu_custom_call.1} parent=1 // pred_fallthru
      _
    // Predicated region
    $region34: #{tpu_custom_call.1} parent=1 // pred_check
      _
    $region35: #{tpu_custom_call.1} parent=1 // pred_check_branch
      %76 = sbr.rel (0) target = $region37
    $region36: #{tpu_custom_call.1} parent=1 // pred_region
      %78 = dma.done [#allocation7], 2048
    $region37: #{tpu_custom_call.1} parent=1 // pred_fallthru
      _
    // Predicated region
    $region38: #{tpu_custom_call.1} parent=1 // pred_check
      _
    $region39: #{tpu_custom_call.1} parent=1 // pred_check_branch
      %80 = sbr.rel (0) target = $region41
    $region40: #{tpu_custom_call.1} parent=1 // pred_region
      %82 = dma.done [#allocation10], 2048
    $region41: #{tpu_custom_call.1} parent=1 // pred_fallthru
      _
    %v83 = vld [vmem:[#allocation6] sm:$0x1]
    %v84 = vld [vmem:[%s3] sm:$0x1]
    %v85 = vld [vmem:[#allocation3] sm:$0xff]
    %v86 = vperm.slane %v85, 0
    %v87 = vlaneseq
    %v88 = vshrl.u32 %v87, 7
    %90 = vset.pattern.permute.xlu0 %v88
    %91 = vperm.xlu0 %90, %v86
    %v92 = vpop.permute.xlu0 %91
    %v93 = vperm.slane %v85, 1
    %v94 = vlaneseq
    %v95 = vshrl.u32 %v94, 7
    %97 = vset.pattern.permute.xlu0 %v95
    %98 = vperm.xlu0 %97, %v93
    %v99 = vpop.permute.xlu0 %98
    %v100 = vperm.slane %v85, 2
    %v101 = vlaneseq
    %v102 = vshrl.u32 %v101, 7
    %104 = vset.pattern.permute.xlu0 %v102
    %105 = vperm.xlu0 %104, %v100
    %v106 = vpop.permute.xlu0 %105
    %v107 = vperm.slane %v85, 3
    %v108 = vlaneseq
    %v109 = vshrl.u32 %v108, 7
    %111 = vset.pattern.permute.xlu0 %v109
    %112 = vperm.xlu0 %111, %v107
    %v113 = vpop.permute.xlu0 %112
    %v114 = vperm.slane %v85, 4
    %v115 = vlaneseq
    %v116 = vshrl.u32 %v115, 7
    %118 = vset.pattern.permute.xlu0 %v116
    %119 = vperm.xlu0 %118, %v114
    %v120 = vpop.permute.xlu0 %119
    %v121 = vperm.slane %v85, 5
    %v122 = vlaneseq
    %v123 = vshrl.u32 %v122, 7
    %125 = vset.pattern.permute.xlu0 %v123
    %126 = vperm.xlu0 %125, %v121
    %v127 = vpop.permute.xlu0 %126
    %v128 = vperm.slane %v85, 6
    %v129 = vlaneseq
    %v130 = vshrl.u32 %v129, 7
    %132 = vset.pattern.permute.xlu0 %v130
    %133 = vperm.xlu0 %132, %v128
    %v134 = vpop.permute.xlu0 %133
    %v135 = vperm.slane %v85, 7
    %v136 = vlaneseq
    %v137 = vshrl.u32 %v136, 7
    %139 = vset.pattern.permute.xlu0 %v137
    %140 = vperm.xlu0 %139, %v135
    %v141 = vpop.permute.xlu0 %140
    %v143 = vperm.slane %v83, 0
    %v145 = vmul.f32 %v92, %v143
    %v146 = vmul.f32 %v99, %v143
    %v147 = vmul.f32 %v106, %v143
    %v148 = vmul.f32 %v113, %v143
    %v149 = vmul.f32 %v120, %v143
    %v150 = vmul.f32 %v127, %v143
    %v151 = vmul.f32 %v134, %v143
    %v152 = vmul.f32 %v141, %v143
    %v154 = vperm.slane %v84, 0
    %v156 = vadd.f32 %v145, %v154
    %v157 = vadd.f32 %v146, %v154
    %v158 = vadd.f32 %v147, %v154
    %v159 = vadd.f32 %v148, %v154
    %v160 = vadd.f32 %v149, %v154
    %v161 = vadd.f32 %v150, %v154
    %v162 = vadd.f32 %v151, %v154
    %v163 = vadd.f32 %v152, %v154
    %164 = vst [vmem:[#allocation2] sm:$0xff] %v156
    %165 = vst [vmem:[#allocation2 + $0x8] sm:$0xff] %v157
    %166 = vst [vmem:[#allocation2 + $0x10] sm:$0xff] %v158
    %167 = vst [vmem:[#allocation2 + $0x18] sm:$0xff] %v159
    %168 = vst [vmem:[#allocation2 + $0x20] sm:$0xff] %v160
    %169 = vst [vmem:[#allocation2 + $0x28] sm:$0xff] %v161
    %170 = vst [vmem:[#allocation2 + $0x30] sm:$0xff] %v162
    %171 = vst [vmem:[#allocation2 + $0x38] sm:$0xff] %v163
    %v172 = vld [vmem:[#allocation8] sm:$0xff]
    %v173 = vld [vmem:[#allocation8 + $0x8] sm:$0xff]
    %v174 = vld [vmem:[#allocation8 + $0x10] sm:$0xff]
    %v175 = vld [vmem:[#allocation8 + $0x18] sm:$0xff]
    %v176 = vld [vmem:[#allocation8 + $0x20] sm:$0xff]
    %v177 = vld [vmem:[#allocation8 + $0x28] sm:$0xff]
    %v178 = vld [vmem:[#allocation8 + $0x30] sm:$0xff]
    %v179 = vld [vmem:[#allocation8 + $0x38] sm:$0xff]
    %v180 = vld [vmem:[#allocation8 + $0x40] sm:$0xff]
    %v181 = vld [vmem:[#allocation8 + $0x48] sm:$0xff]
    %v182 = vld [vmem:[#allocation8 + $0x50] sm:$0xff]
    %v183 = vld [vmem:[#allocation8 + $0x58] sm:$0xff]
    %v184 = vld [vmem:[#allocation8 + $0x60] sm:$0xff]
    %v185 = vld [vmem:[#allocation8 + $0x68] sm:$0xff]
    %v186 = vld [vmem:[#allocation8 + $0x70] sm:$0xff]
    %v187 = vld [vmem:[#allocation8 + $0x78] sm:$0xff]
    %188 = vmatpush.msra.mxu0 %v187
    %189 = vmatpush.msra.mxu0 %v186
    %190 = vmatpush.msra.mxu0 %v185
    %191 = vmatpush.msra.mxu0 %v184
    %192 = vmatpush.msra.mxu0 %v183
    %193 = vmatpush.msra.mxu0 %v182
    %194 = vmatpush.msra.mxu0 %v181
    %195 = vmatpush.msra.mxu0 %v180
    %196 = vmatpush.msra.mxu0 %v179
    %197 = vmatpush.msra.mxu0 %v178
    %198 = vmatpush.msra.mxu0 %v177
    %199 = vmatpush.msra.mxu0 %v176
    %200 = vmatpush.msra.mxu0 %v175
    %201 = vmatpush.msra.mxu0 %v174
    %202 = vmatpush.msra.mxu0 %v173
    %203 = vmatpush.msra.mxu0 %v172
    %204 = vmatmul.f32.gmra.mxu0 0.0
    %v205 = vpop.f32.mrf.mxu0
    %v206 = vadd.f32 0.0, %v205
    %207 = vdwg.mxu0
    %v208 = vld [vmem:[#allocation2] sm:$0xff]
    %v209 = vadd.f32 %v208, %v206
    %v210 = vmax.f32 %v209, 0.0
    %211 = vmatpush.msra.mxu0 %v187
    %212 = vmatpush.msra.mxu0 %v186
    %213 = vmatpush.msra.mxu0 %v185
    %214 = vmatpush.msra.mxu0 %v184
    %215 = vmatpush.msra.mxu0 %v183
    %216 = vmatpush.msra.mxu0 %v182
    %217 = vmatpush.msra.mxu0 %v181
    %218 = vmatpush.msra.mxu0 %v180
    %219 = vmatpush.msra.mxu0 %v179
    %220 = vmatpush.msra.mxu0 %v178
    %221 = vmatpush.msra.mxu0 %v177
    %222 = vmatpush.msra.mxu0 %v176
    %223 = vmatpush.msra.mxu0 %v175
    %224 = vmatpush.msra.mxu0 %v174
    %225 = vmatpush.msra.mxu0 %v173
    %226 = vmatpush.msra.mxu0 %v172
    %227 = vmatmul.f32.gmra.mxu0 %v210
    %v228 = vpop.f32.mrf.mxu0
    %v229 = vadd.f32 0.0, %v228
    %230 = vdwg.mxu0
    %s231 = scalar_lea.vmem [#allocation2], 8
    %v232 = vld [vmem:[%s231] sm:$0xff]
    %v233 = vadd.f32 %v232, %v229
    %v234 = vmax.f32 %v233, 0.0
    %235 = vmatpush.msra.mxu0 %v187
    %236 = vmatpush.msra.mxu0 %v186
    %237 = vmatpush.msra.mxu0 %v185
    %238 = vmatpush.msra.mxu0 %v184
    %239 = vmatpush.msra.mxu0 %v183
    %240 = vmatpush.msra.mxu0 %v182
    %241 = vmatpush.msra.mxu0 %v181
    %242 = vmatpush.msra.mxu0 %v180
    %243 = vmatpush.msra.mxu0 %v179
    %244 = vmatpush.msra.mxu0 %v178
    %245 = vmatpush.msra.mxu0 %v177
    %246 = vmatpush.msra.mxu0 %v176
    %247 = vmatpush.msra.mxu0 %v175
    %248 = vmatpush.msra.mxu0 %v174
    %249 = vmatpush.msra.mxu0 %v173
    %250 = vmatpush.msra.mxu0 %v172
    %251 = vmatmul.f32.gmra.mxu0 %v234
    %v252 = vpop.f32.mrf.mxu0
    %v253 = vadd.f32 0.0, %v252
    %254 = vdwg.mxu0
    %s255 = scalar_lea.vmem [#allocation2], 16
    %v256 = vld [vmem:[%s255] sm:$0xff]
    %v257 = vadd.f32 %v256, %v253
    %v258 = vmax.f32 %v257, 0.0
    %259 = vmatpush.msra.mxu0 %v187
    %260 = vmatpush.msra.mxu0 %v186
    %261 = vmatpush.msra.mxu0 %v185
    %262 = vmatpush.msra.mxu0 %v184
    %263 = vmatpush.msra.mxu0 %v183
    %264 = vmatpush.msra.mxu0 %v182
    %265 = vmatpush.msra.mxu0 %v181
    %266 = vmatpush.msra.mxu0 %v180
    %267 = vmatpush.msra.mxu0 %v179
    %268 = vmatpush.msra.mxu0 %v178
    %269 = vmatpush.msra.mxu0 %v177
    %270 = vmatpush.msra.mxu0 %v176
    %271 = vmatpush.msra.mxu0 %v175
    %272 = vmatpush.msra.mxu0 %v174
    %273 = vmatpush.msra.mxu0 %v173
    %274 = vmatpush.msra.mxu0 %v172
    %275 = vmatmul.f32.gmra.mxu0 %v258
    %v276 = vpop.f32.mrf.mxu0
    %v277 = vadd.f32 0.0, %v276
    %278 = vdwg.mxu0
    %s279 = scalar_lea.vmem [#allocation2], 24
    %v280 = vld [vmem:[%s279] sm:$0xff]
    %v281 = vadd.f32 %v280, %v277
    %v282 = vmax.f32 %v281, 0.0
    %283 = vmatpush.msra.mxu0 %v187
    %284 = vmatpush.msra.mxu0 %v186
    %285 = vmatpush.msra.mxu0 %v185
    %286 = vmatpush.msra.mxu0 %v184
    %287 = vmatpush.msra.mxu0 %v183
    %288 = vmatpush.msra.mxu0 %v182
    %289 = vmatpush.msra.mxu0 %v181
    %290 = vmatpush.msra.mxu0 %v180
    %291 = vmatpush.msra.mxu0 %v179
    %292 = vmatpush.msra.mxu0 %v178
    %293 = vmatpush.msra.mxu0 %v177
    %294 = vmatpush.msra.mxu0 %v176
    %295 = vmatpush.msra.mxu0 %v175
    %296 = vmatpush.msra.mxu0 %v174
    %297 = vmatpush.msra.mxu0 %v173
    %298 = vmatpush.msra.mxu0 %v172
    %299 = vmatmul.f32.gmra.mxu0 %v282
    %v300 = vpop.f32.mrf.mxu0
    %v301 = vadd.f32 0.0, %v300
    %302 = vdwg.mxu0
    %s303 = scalar_lea.vmem [#allocation2], 32
    %v304 = vld [vmem:[%s303] sm:$0xff]
    %v305 = vadd.f32 %v304, %v301
    %v306 = vmax.f32 %v305, 0.0
    %307 = vmatpush.msra.mxu0 %v187
    %308 = vmatpush.msra.mxu0 %v186
    %309 = vmatpush.msra.mxu0 %v185
    %310 = vmatpush.msra.mxu0 %v184
    %311 = vmatpush.msra.mxu0 %v183
    %312 = vmatpush.msra.mxu0 %v182
    %313 = vmatpush.msra.mxu0 %v181
    %314 = vmatpush.msra.mxu0 %v180
    %315 = vmatpush.msra.mxu0 %v179
    %316 = vmatpush.msra.mxu0 %v178
    %317 = vmatpush.msra.mxu0 %v177
    %318 = vmatpush.msra.mxu0 %v176
    %319 = vmatpush.msra.mxu0 %v175
    %320 = vmatpush.msra.mxu0 %v174
    %321 = vmatpush.msra.mxu0 %v173
    %322 = vmatpush.msra.mxu0 %v172
    %323 = vmatmul.f32.gmra.mxu0 %v306
    %v324 = vpop.f32.mrf.mxu0
    %v325 = vadd.f32 0.0, %v324
    %326 = vdwg.mxu0
    %s327 = scalar_lea.vmem [#allocation2], 40
    %v328 = vld [vmem:[%s327] sm:$0xff]
    %v329 = vadd.f32 %v328, %v325
    %v330 = vmax.f32 %v329, 0.0
    %331 = vmatpush.msra.mxu0 %v187
    %332 = vmatpush.msra.mxu0 %v186
    %333 = vmatpush.msra.mxu0 %v185
    %334 = vmatpush.msra.mxu0 %v184
    %335 = vmatpush.msra.mxu0 %v183
    %336 = vmatpush.msra.mxu0 %v182
    %337 = vmatpush.msra.mxu0 %v181
    %338 = vmatpush.msra.mxu0 %v180
    %339 = vmatpush.msra.mxu0 %v179
    %340 = vmatpush.msra.mxu0 %v178
    %341 = vmatpush.msra.mxu0 %v177
    %342 = vmatpush.msra.mxu0 %v176
    %343 = vmatpush.msra.mxu0 %v175
    %344 = vmatpush.msra.mxu0 %v174
    %345 = vmatpush.msra.mxu0 %v173
    %346 = vmatpush.msra.mxu0 %v172
    %347 = vmatmul.f32.gmra.mxu0 %v330
    %v348 = vpop.f32.mrf.mxu0
    %v349 = vadd.f32 0.0, %v348
    %350 = vdwg.mxu0
    %s351 = scalar_lea.vmem [#allocation2], 48
    %v352 = vld [vmem:[%s351] sm:$0xff]
    %v353 = vadd.f32 %v352, %v349
    %v354 = vmax.f32 %v353, 0.0
    %355 = vmatpush.msra.mxu0 %v187
    %356 = vmatpush.msra.mxu0 %v186
    %357 = vmatpush.msra.mxu0 %v185
    %358 = vmatpush.msra.mxu0 %v184
    %359 = vmatpush.msra.mxu0 %v183
    %360 = vmatpush.msra.mxu0 %v182
    %361 = vmatpush.msra.mxu0 %v181
    %362 = vmatpush.msra.mxu0 %v180
    %363 = vmatpush.msra.mxu0 %v179
    %364 = vmatpush.msra.mxu0 %v178
    %365 = vmatpush.msra.mxu0 %v177
    %366 = vmatpush.msra.mxu0 %v176
    %367 = vmatpush.msra.mxu0 %v175
    %368 = vmatpush.msra.mxu0 %v174
    %369 = vmatpush.msra.mxu0 %v173
    %370 = vmatpush.msra.mxu0 %v172
    %371 = vmatmul.f32.gmra.mxu0 %v354
    %v372 = vpop.f32.mrf.mxu0
    %v373 = vadd.f32 0.0, %v372
    %374 = vdwg.mxu0
    %s375 = scalar_lea.vmem [#allocation2], 56
    %v376 = vld [vmem:[%s375] sm:$0xff]
    %v377 = vadd.f32 %v376, %v373
    %v378 = vmax.f32 %v377, 0.0
    %v379 = vld [vmem:[#allocation9] sm:$0xff]
    %v380 = vld [vmem:[#allocation9 + $0x8] sm:$0xff]
    %v381 = vld [vmem:[#allocation9 + $0x10] sm:$0xff]
    %v382 = vld [vmem:[#allocation9 + $0x18] sm:$0xff]
    %v383 = vld [vmem:[#allocation9 + $0x20] sm:$0xff]
    %v384 = vld [vmem:[#allocation9 + $0x28] sm:$0xff]
    %v385 = vld [vmem:[#allocation9 + $0x30] sm:$0xff]
    %v386 = vld [vmem:[#allocation9 + $0x38] sm:$0xff]
    %v387 = vld [vmem:[#allocation9 + $0x40] sm:$0xff]
    %v388 = vld [vmem:[#allocation9 + $0x48] sm:$0xff]
    %v389 = vld [vmem:[#allocation9 + $0x50] sm:$0xff]
    %v390 = vld [vmem:[#allocation9 + $0x58] sm:$0xff]
    %v391 = vld [vmem:[#allocation9 + $0x60] sm:$0xff]
    %v392 = vld [vmem:[#allocation9 + $0x68] sm:$0xff]
    %v393 = vld [vmem:[#allocation9 + $0x70] sm:$0xff]
    %v394 = vld [vmem:[#allocation9 + $0x78] sm:$0xff]
    %v395 = vld [vmem:[%s5] sm:$0x1]
    %v397 = vperm.slane %v395, 0
    %399 = vmatpush.msra.mxu0 %v394
    %400 = vmatpush.msra.mxu0 %v393
    %401 = vmatpush.msra.mxu0 %v392
    %402 = vmatpush.msra.mxu0 %v391
    %403 = vmatpush.msra.mxu0 %v390
    %404 = vmatpush.msra.mxu0 %v389
    %405 = vmatpush.msra.mxu0 %v388
    %406 = vmatpush.msra.mxu0 %v387
    %407 = vmatpush.msra.mxu0 %v386
    %408 = vmatpush.msra.mxu0 %v385
    %409 = vmatpush.msra.mxu0 %v384
    %410 = vmatpush.msra.mxu0 %v383
    %411 = vmatpush.msra.mxu0 %v382
    %412 = vmatpush.msra.mxu0 %v381
    %413 = vmatpush.msra.mxu0 %v380
    %414 = vmatpush.msra.mxu0 %v379
    %415 = vmatmul.f32.gmra.mxu0 %v378
    %v416 = vpop.f32.mrf.mxu0
    %v417 = vadd.f32 %v397, %v416
    %418 = vdwg.mxu0
    %419 = vst [vmem:[#allocation11] sm:$0xff] %v417
    // Predicated region
    $region42: #{tpu_custom_call.1} parent=1 // pred_check
      _
    $region43: #{tpu_custom_call.1} parent=1 // pred_check_branch
      %421 = sbr.rel (0) target = $region45
    $region44: #{tpu_custom_call.1} parent=1 // pred_region
      %423 = vsyncadd [#allocation5], 0
      %s425 = sshll.u32 [#allocation11], 4
      %s426 = int_to_ptr.vmem [resolvable:$true] %s425
      %s427 = sshll.u32 %s6, 4
      %s428 = int_to_ptr.hbm [resolvable:$true] %s427
      %430 = dma.vmem_to_hbm [thread:$0]  %s426, 128, %s428, [#allocation5]
    $region45: #{tpu_custom_call.1} parent=1 // pred_fallthru
      _
    // Predicated region
    $region46: #{tpu_custom_call.1} parent=1 // pred_check
      _
    $region47: #{tpu_custom_call.1} parent=1 // pred_check_branch
      %432 = sbr.rel (0) target = $region49
    $region48: #{tpu_custom_call.1} parent=1 // pred_region
      %434 = dma.done [#allocation5], 128
    $region49: #{tpu_custom_call.1} parent=1 // pred_fallthru
      _
    %435 = vsyncpa [#allocation4], 1
    %436 = vsyncpa [#allocation7], 1
    %437 = vsyncpa [#allocation10], 1
    %438 = vsyncpa [#allocation5], 1

</llo_original>
